<compile_context>
chip_gen: v6e
topology: v6e:2x2x1
jax: 0.10.0
libtpu: 0.0.40
codegen_flags: <defaults>
</compile_context>

<pallas_src>
import functools

import numpy as np
import jax
import jax.numpy as jnp
from jax.experimental import pallas as pl
from jax.experimental.pallas import tpu as pltpu


_LANE = 128
_NEG_BIG = -1e30  # bias for padded output columns under logSoftmax


def _make_mlp_kernel(num_layers, hiddens_nonlinearity, final_nonlinearity):
    """Builds a fused MLP forward kernel for `num_layers` Linear layers."""

    def kernel(*refs):
        # refs = (x_ref, w0, b0, w1, b1, ..., w_{L-1}, b_{L-1}, out_ref)
        x_ref = refs[0]
        out_ref = refs[-1]
        param_refs = refs[1:-1]

        h = x_ref[...]  # keep native dtype; cast at the dot (bf16 x = less DMA)
        for i in range(num_layers):
            w_ref = param_refs[2 * i]           # bf16 [in, out], VMEM-resident
            b = param_refs[2 * i + 1][...]      # f32 (1, out)
            # MXU matmul: bf16 x bf16 -> f32 accumulation, then f32 bias.
            z = jnp.dot(h.astype(w_ref.dtype), w_ref[...],
                        preferred_element_type=jnp.float32) + b
            if i < num_layers - 1:
                if hiddens_nonlinearity == "relu":
                    # relu commutes with the down-cast required by the next
                    # MXU dot; post-cast relu halves VALU work on bf16-VPU
                    # chips (v6e/v7x) and is bit-identical in value.
                    nxt = param_refs[2 * (i + 1)].dtype
                    h = jnp.maximum(z.astype(nxt), 0)
                else:  # 'tanh' stays in f32 (no bf16 EUP on v5e)
                    h = jnp.tanh(z)
            else:
                h = z

        if final_nonlinearity == "logSoftmax":
            # Stable logSoftmax over features. Padded columns carry ~-1e30,
            # so they never win the max and contribute exp(.)=0 to the sum.
            m = jnp.max(h, axis=-1, keepdims=True)
            zc = h - m
            lse = jnp.log(jnp.sum(jnp.exp(zc), axis=-1, keepdims=True))
            h = zc - lse
        else:  # 'sigmoid' via a single EUP tanh; exact (no approx reciprocal)
            h = 0.5 * (jnp.tanh(0.5 * h) + 1.0)

        out_ref[...] = h.astype(out_ref.dtype)

    return kernel


def init_mlp_params(key, in_sz, h_szs, out_sz, *, weight_dtype=jnp.bfloat16):
    """Init matching nn.Linear's default U(-1/sqrt(fan_in), 1/sqrt(fan_in)).

    Weights are stored transposed relative to PyTorch: shape [in, out], bf16
    (deliberate precision reduction vs the f32 nn.Module; the reference
    mirrors it). Biases are (1, out) float32.
    """
    layer_szs = [in_sz] + list(h_szs) + [out_sz]
    params = []
    for i in range(1, len(layer_szs)):
        fan_in, fan_out = layer_szs[i - 1], layer_szs[i]
        key, kw, kb = jax.random.split(key, 3)
        bound = 1.0 / (fan_in ** 0.5)
        w = jax.random.uniform(kw, (fan_in, fan_out), jnp.float32, -bound, bound)
        b = jax.random.uniform(kb, (1, fan_out), jnp.float32, -bound, bound)
        params.append((w.astype(weight_dtype), b))
    return params


def _tensorcores_per_chip():
    """Best-effort detection of TensorCores per chip (v7x exposes 2)."""
    try:
        kind = (getattr(jax.devices()[0], "device_kind", "") or "").lower()
    except Exception:
        kind = ""
    return 2 if "v7" in kind else 1


def _pick_batch_tile(batch, *, num_cores=1, max_tile=2048):
    """Largest valid batch tile (tb | batch, tb%8==0 or tb==batch).

    Single-core chips: fewest grid steps (largest tile).
    Multi-core (v7x): at least num_cores steps, preferably >= 2 per core.
    """
    def ok(tb):
        return batch % tb == 0 and (tb % 8 == 0 or tb == batch)

    cands = [tb for tb in range(min(batch, max_tile), 0, -1) if ok(tb)]
    if not cands:
        return batch
    if num_cores <= 1:
        return cands[0]
    for tb in cands:  # >= 2 steps per core, evenly divisible across cores
        steps = batch // tb
        if steps % num_cores == 0 and steps >= 2 * num_cores:
            return tb
    for tb in cands:  # at least one step per core
        steps = batch // tb
        if steps % num_cores == 0 and steps >= num_cores:
            return tb
    return cands[0]


def _vmem_bytes_estimate(tb, in_sz, flat_params, out_pad, x_dtype, out_dtype):
    est = 2 * tb * in_sz * np.dtype(x_dtype).itemsize          # x (dbl-buffered)
    est += 2 * tb * out_pad * np.dtype(out_dtype).itemsize     # out (dbl-buffered)
    for p in flat_params:                                      # weights/biases
        est += 2 * int(p.size) * np.dtype(p.dtype).itemsize
    feats = [in_sz, out_pad] + [int(p.shape[-1]) for p in flat_params]
    est += 4 * tb * max(feats) * 4                             # live f32 activations + slack
    return int(est)


@functools.partial(jax.jit, static_argnames=("hiddens_nonlinearity",
                                             "final_nonlinearity",
                                             "block_batch",
                                             "out_dtype",
                                             "return_padded"))
def mlp_forward(x, params, *, hiddens_nonlinearity="relu",
                final_nonlinearity="logSoftmax", block_batch=None,
                out_dtype=None, return_padded=False):
    assert hiddens_nonlinearity in ("relu", "tanh")
    assert final_nonlinearity in ("logSoftmax", "sigmoid")

    num_layers = len(params)
    batch, in_sz = x.shape
    out_sz = params[-1][0].shape[1]
    out_pad = ((out_sz + _LANE - 1) // _LANE) * _LANE
    out_dt = x.dtype if out_dtype is None else np.dtype(out_dtype)

    tb = (block_batch if block_batch is not None
          else _pick_batch_tile(batch, num_cores=_tensorcores_per_chip()))
    assert batch % tb == 0, "batch tile must divide batch"
    grid = (batch // tb,)

    # Lane-dense final layer: pad out dim to a multiple of 128 lanes with zero
    # weight columns. Bias padding: -1e30 for logSoftmax (ignored by the
    # reduction), 0 for sigmoid (avoids inf/NaN intermediates in flight).
    pad_bias = _NEG_BIG if final_nonlinearity == "logSoftmax" else 0.0
    flat_params = []
    for li, (w, b) in enumerate(params):
        if li == num_layers - 1 and out_pad != out_sz:
            w = jnp.pad(w, ((0, 0), (0, out_pad - out_sz)))
            b = jnp.pad(b, ((0, 0), (0, out_pad - out_sz)),
                        constant_values=pad_bias)
        flat_params.extend([w, b])

    kernel = _make_mlp_kernel(num_layers, hiddens_nonlinearity,
                              final_nonlinearity)

    # x / out: batch-tiled. Weights & biases: full-extent blocks with a
    # constant index_map -> DMA'd once, VMEM-resident across grid steps.
    # TODO(synk): pipeline_mode=pl.Buffered(1) on the weight specs would drop
    # their redundant second buffer; negligible at these layer widths, revisit
    # if the MLP is widened toward v7x's 64 MiB VMEM.
    in_specs = [pl.BlockSpec((tb, in_sz), lambda i: (i, 0))]
    for p in flat_params:
        in_specs.append(pl.BlockSpec(p.shape, lambda i: (0, 0)))
    out_spec = pl.BlockSpec((tb, out_pad), lambda i: (i, 0))

    vmem_est = _vmem_bytes_estimate(tb, in_sz, flat_params, out_pad,
                                    x.dtype, out_dt)
    vmem_limit = int(min(max(2 * vmem_est, 32 << 20), 64 << 20))

    out_padded = pl.pallas_call(
        kernel,
        out_shape=jax.ShapeDtypeStruct((batch, out_pad), out_dt),
        grid=grid,
        in_specs=in_specs,
        out_specs=out_spec,
        compiler_params=pltpu.CompilerParams(
            dimension_semantics=("parallel",),   # megacore sharding on v7x
            vmem_limit_bytes=vmem_limit,
        ),
    )(x, *flat_params)

    if return_padded:
        # Consumer slices / fuses the padded logits away -> no extra HBM pass.
        return out_padded
    return out_padded[:, :out_sz]


def mlp_forward_ref(x, params, *, hiddens_nonlinearity="relu",
                    final_nonlinearity="logSoftmax", out_dtype=None):
    """Pure-JAX reference mirroring the kernel's bf16-matmul / f32-accumulate."""
    out_dt = x.dtype if out_dtype is None else out_dtype
    h = x
    for i, (w, b) in enumerate(params):
        h = jnp.dot(h.astype(w.dtype), w,
                    preferred_element_type=jnp.float32) + b.astype(jnp.float32)
        if i < len(params) - 1:
            h = jnp.maximum(h, 0.0) if hiddens_nonlinearity == "relu" else jnp.tanh(h)
    if final_nonlinearity == "logSoftmax":
        h = jax.nn.log_softmax(h, axis=-1)
    else:
        h = jax.nn.sigmoid(h)
    return h.astype(out_dt)


if __name__ == "__main__":
    key = jax.random.PRNGKey(0)
    k_x, k_p = jax.random.split(key)

    # Small, module-consistent shapes: in_sz=32, hidden sizes [64, 32], out_sz=16.
    batch, in_sz, h_szs, out_sz = 128, 32, [64, 32], 16

    x = jax.random.normal(k_x, (batch, in_sz), dtype=jnp.float32)
    params = init_mlp_params(k_p, in_sz, h_szs, out_sz)

    # 1) relu + logSoftmax, default (generation-aware) tile selection.
    out = mlp_forward(x, params, hiddens_nonlinearity="relu",
                      final_nonlinearity="logSoftmax")
    out = jax.block_until_ready(out)
    ref = mlp_forward_ref(x, params, hiddens_nonlinearity="relu",
                          final_nonlinearity="logSoftmax")
    assert out.shape == (batch, out_sz)
    assert bool(jnp.all(jnp.isfinite(out)))
    assert jnp.allclose(out, ref, atol=2e-4, rtol=2e-4), "logSoftmax mismatch"

    # 2) tanh + sigmoid (exact tanh-based sigmoid -> tight tolerance).
    out2 = mlp_forward(x, params, hiddens_nonlinearity="tanh",
                       final_nonlinearity="sigmoid")
    out2 = jax.block_until_ready(out2)
    ref2 = mlp_forward_ref(x, params, hiddens_nonlinearity="tanh",
                           final_nonlinearity="sigmoid")
    assert out2.shape == (batch, out_sz)
    assert jnp.allclose(out2, ref2, atol=2e-4, rtol=2e-4), "sigmoid mismatch"

    # 3) bf16 end-to-end I/O path: bf16 input from "upstream", padded bf16
    #    logits returned for the consumer to slice (halved HBM traffic).
    x_bf16 = x.astype(jnp.bfloat16)
    out3 = mlp_forward(x_bf16, params, hiddens_nonlinearity="relu",
                       final_nonlinearity="logSoftmax",
                       out_dtype=jnp.bfloat16, return_padded=True)
    out3 = jax.block_until_ready(out3)
    ref3 = mlp_forward_ref(x_bf16, params, hiddens_nonlinearity="relu",
                           final_nonlinearity="logSoftmax",
                           out_dtype=jnp.bfloat16)
    assert out3.shape == (batch, _LANE)
    assert jnp.allclose(out3[:, :out_sz].astype(jnp.float32),
                        ref3.astype(jnp.float32),
                        atol=3e-2, rtol=3e-2), "bf16 path mismatch"

    # TODO(synk): MLP.get_embedding() is a host-side weight inspection helper,
    # not part of the forward pass; no kernel equivalent needed.
    print("KERNEL_OK")
</pallas_src>

<mosaic_0001>
module attributes {stable_mosaic.version = 11 : i64} {
  func.func @kernel(%arg0: i32, %arg1: memref<128x32xf32, #tpu.memory_space<vmem>>, %arg2: memref<32x64xbf16, #tpu.memory_space<vmem>>, %arg3: memref<1x64xf32, #tpu.memory_space<vmem>>, %arg4: memref<64x32xbf16, #tpu.memory_space<vmem>>, %arg5: memref<1x32xf32, #tpu.memory_space<vmem>>, %arg6: memref<32x128xbf16, #tpu.memory_space<vmem>>, %arg7: memref<1x128xf32, #tpu.memory_space<vmem>>, %arg8: memref<128x128xf32, #tpu.memory_space<vmem>>) attributes {dimension_semantics = [#tpu.dimension_semantics<parallel>], iteration_bounds = array<i64: 1>, scalar_prefetch = 0 : i64, scratch_operands = 0 : i64, tpu.core_type = #tpu.core_type<tc>, window_params = [{transform_indices = @transform_0, window_bounds = array<i64: 128, 32>}, {pipeline_mode = #tpu.pipeline_mode<synchronous>, transform_indices = @transform_1, window_bounds = array<i64: 32, 64>}, {pipeline_mode = #tpu.pipeline_mode<synchronous>, transform_indices = @transform_2, window_bounds = array<i64: 1, 64>}, {pipeline_mode = #tpu.pipeline_mode<synchronous>, transform_indices = @transform_3, window_bounds = array<i64: 64, 32>}, {pipeline_mode = #tpu.pipeline_mode<synchronous>, transform_indices = @transform_4, window_bounds = array<i64: 1, 32>}, {pipeline_mode = #tpu.pipeline_mode<synchronous>, transform_indices = @transform_5, window_bounds = array<i64: 32, 128>}, {pipeline_mode = #tpu.pipeline_mode<synchronous>, transform_indices = @transform_6, window_bounds = array<i64: 1, 128>}, {transform_indices = @transform_7, window_bounds = array<i64: 128, 128>}]} {
    %c0 = arith.constant 0 : index
    %c0_0 = arith.constant 0 : index
    %0 = vector.load %arg1[%c0, %c0_0] : memref<128x32xf32, #tpu.memory_space<vmem>>, vector<128x32xf32>
    %c0_1 = arith.constant 0 : index
    %c0_2 = arith.constant 0 : index
    %1 = vector.load %arg3[%c0_1, %c0_2] : memref<1x64xf32, #tpu.memory_space<vmem>>, vector<1x64xf32>
    %2 = arith.truncf %0 : vector<128x32xf32> to vector<128x32xbf16>
    %c0_3 = arith.constant 0 : index
    %c0_4 = arith.constant 0 : index
    %3 = vector.load %arg2[%c0_3, %c0_4] : memref<32x64xbf16, #tpu.memory_space<vmem>>, vector<32x64xbf16>
    %cst = arith.constant dense<0.000000e+00> : vector<128x64xf32>
    %4 = tpu.matmul %2, %3, %cst {dimension_numbers = #tpu.dot_dimension_numbers<[1], [0], [0], [1], [0, 0, 1, 1], [], []>} : vector<128x32xbf16>, vector<32x64xbf16>, vector<128x64xf32> -> vector<128x64xf32>
    %5 = vector.broadcast %1 : vector<1x64xf32> to vector<128x64xf32>
    %6 = arith.addf %4, %5 : vector<128x64xf32>
    %7 = arith.truncf %6 : vector<128x64xf32> to vector<128x64xbf16>
    %cst_5 = arith.constant 0.000000e+00 : bf16
    %8 = vector.broadcast %cst_5 : bf16 to vector<128x64xbf16>
    %9 = arith.maximumf %7, %8 : vector<128x64xbf16>
    %c0_6 = arith.constant 0 : index
    %c0_7 = arith.constant 0 : index
    %10 = vector.load %arg5[%c0_6, %c0_7] : memref<1x32xf32, #tpu.memory_space<vmem>>, vector<1x32xf32>
    %c0_8 = arith.constant 0 : index
    %c0_9 = arith.constant 0 : index
    %11 = vector.load %arg4[%c0_8, %c0_9] : memref<64x32xbf16, #tpu.memory_space<vmem>>, vector<64x32xbf16>
    %cst_10 = arith.constant dense<0.000000e+00> : vector<128x32xf32>
    %12 = tpu.matmul %9, %11, %cst_10 {dimension_numbers = #tpu.dot_dimension_numbers<[1], [0], [0], [1], [0, 0, 1, 1], [], []>} : vector<128x64xbf16>, vector<64x32xbf16>, vector<128x32xf32> -> vector<128x32xf32>
    %13 = vector.broadcast %10 : vector<1x32xf32> to vector<128x32xf32>
    %14 = arith.addf %12, %13 : vector<128x32xf32>
    %15 = arith.truncf %14 : vector<128x32xf32> to vector<128x32xbf16>
    %cst_11 = arith.constant 0.000000e+00 : bf16
    %16 = vector.broadcast %cst_11 : bf16 to vector<128x32xbf16>
    %17 = arith.maximumf %15, %16 : vector<128x32xbf16>
    %c0_12 = arith.constant 0 : index
    %c0_13 = arith.constant 0 : index
    %18 = vector.load %arg7[%c0_12, %c0_13] : memref<1x128xf32, #tpu.memory_space<vmem>>, vector<1x128xf32>
    %c0_14 = arith.constant 0 : index
    %c0_15 = arith.constant 0 : index
    %19 = vector.load %arg6[%c0_14, %c0_15] : memref<32x128xbf16, #tpu.memory_space<vmem>>, vector<32x128xbf16>
    %cst_16 = arith.constant dense<0.000000e+00> : vector<128x128xf32>
    %20 = tpu.matmul %17, %19, %cst_16 {dimension_numbers = #tpu.dot_dimension_numbers<[1], [0], [0], [1], [0, 0, 1, 1], [], []>} : vector<128x32xbf16>, vector<32x128xbf16>, vector<128x128xf32> -> vector<128x128xf32>
    %21 = vector.broadcast %18 : vector<1x128xf32> to vector<128x128xf32>
    %22 = arith.addf %20, %21 : vector<128x128xf32>
    %cst_17 = arith.constant dense<0xFF800000> : vector<128xf32>
    %23 = vector.multi_reduction <maximumf>, %22, %cst_17 [1] : vector<128x128xf32> to vector<128xf32>
    %24 = vector.shape_cast %23 : vector<128xf32> to vector<128x1xf32>
    %25 = vector.broadcast %24 : vector<128x1xf32> to vector<128x128xf32>
    %26 = arith.subf %22, %25 : vector<128x128xf32>
    %27 = math.exp %26 : vector<128x128xf32>
    %cst_18 = arith.constant dense<0.000000e+00> : vector<128xf32>
    %28 = vector.multi_reduction <add>, %27, %cst_18 [1] : vector<128x128xf32> to vector<128xf32>
    %29 = vector.shape_cast %28 : vector<128xf32> to vector<128x1xf32>
    %30 = math.log %29 : vector<128x1xf32>
    %31 = vector.broadcast %30 : vector<128x1xf32> to vector<128x128xf32>
    %32 = arith.subf %26, %31 : vector<128x128xf32>
    %c0_19 = arith.constant 0 : index
    %c0_20 = arith.constant 0 : index
    %33 = vector.load %arg8[%c0_19, %c0_20] : memref<128x128xf32, #tpu.memory_space<vmem>>, vector<128x128xf32>
    tpu.vector_store %arg8[%c0_19, %c0_20], %32 {strides = array<i32>} : memref<128x128xf32, #tpu.memory_space<vmem>>, vector<128x128xf32>,
    return
  }
  func.func @transform_0(%arg0: i32) -> (i32, i32) {
    %c0_i32 = arith.constant 0 : i32
    %c0_i32_0 = arith.constant 0 : i32
    return %arg0, %c0_i32 : i32, i32
  }
  func.func @transform_1(%arg0: i32) -> (i32, i32) {
    %c0_i32 = arith.constant 0 : i32
    %c0_i32_0 = arith.constant 0 : i32
    %c0_i32_1 = arith.constant 0 : i32
    return %c0_i32, %c0_i32_0 : i32, i32
  }
  func.func @transform_2(%arg0: i32) -> (i32, i32) {
    %c0_i32 = arith.constant 0 : i32
    %c0_i32_0 = arith.constant 0 : i32
    %c0_i32_1 = arith.constant 0 : i32
    return %c0_i32, %c0_i32_0 : i32, i32
  }
  func.func @transform_3(%arg0: i32) -> (i32, i32) {
    %c0_i32 = arith.constant 0 : i32
    %c0_i32_0 = arith.constant 0 : i32
    %c0_i32_1 = arith.constant 0 : i32
    return %c0_i32, %c0_i32_0 : i32, i32
  }
  func.func @transform_4(%arg0: i32) -> (i32, i32) {
    %c0_i32 = arith.constant 0 : i32
    %c0_i32_0 = arith.constant 0 : i32
    %c0_i32_1 = arith.constant 0 : i32
    return %c0_i32, %c0_i32_0 : i32, i32
  }
  func.func @transform_5(%arg0: i32) -> (i32, i32) {
    %c0_i32 = arith.constant 0 : i32
    %c0_i32_0 = arith.constant 0 : i32
    %c0_i32_1 = arith.constant 0 : i32
    return %c0_i32, %c0_i32_0 : i32, i32
  }
  func.func @transform_6(%arg0: i32) -> (i32, i32) {
    %c0_i32 = arith.constant 0 : i32
    %c0_i32_0 = arith.constant 0 : i32
    %c0_i32_1 = arith.constant 0 : i32
    return %c0_i32, %c0_i32_0 : i32, i32
  }
  func.func @transform_7(%arg0: i32) -> (i32, i32) {
    %c0_i32 = arith.constant 0 : i32
    %c0_i32_0 = arith.constant 0 : i32
    return %arg0, %c0_i32 : i32, i32
  }
}

</mosaic_0001>

<llo_original>
// kernel: mlp_forward.1
$region0: #{mlp_forward.1}
  #allocation0 [shape = 'u32[]', space=smem, size = 0x4, offset = 0x4, fixed_abs, tag = 'smem constant byte address 0x4 - core index']
  #allocation1 [shape = 'u32[144,128]{1,0:T(1,128)}', space=vmem, size = 0x12000, scoped, tag = 'internal scratch']
  %s0 = inlined_call_operand.vmem [shape: f32[128,32], index: 0, kind: input, shape index: {}]
  %s1 = inlined_call_operand.vmem [shape: bf16[32,64], index: 1, kind: input, shape index: {}]
  %s2 = inlined_call_operand.vmem [shape: f32[1,64], index: 2, kind: input, shape index: {}]
  %s3 = inlined_call_operand.vmem [shape: bf16[64,32], index: 3, kind: input, shape index: {}]
  %s4 = inlined_call_operand.vmem [shape: f32[1,32], index: 4, kind: input, shape index: {}]
  %s5 = inlined_call_operand.vmem [shape: bf16[32,128], index: 5, kind: input, shape index: {}]
  %s6 = inlined_call_operand.vmem [shape: f32[1,128], index: 6, kind: input, shape index: {}]
  %s7 = inlined_call_operand.vmem [shape: f32[128,128], index: 7, kind: output, shape index: {}]
  %s8 = sld [smem:[#allocation0]]
  $region38: #{mlp_forward.1} parent=0
    _
  %s10 = ssub.s32 1, %s8
  %s11 = scalar_select 0, %s10, %s8
  // Predicated region
  $region2: #{mlp_forward.1} parent=0 // pred_check
    _
  $region3: #{mlp_forward.1} parent=0 // pred_check_branch
    %13 = sbr.rel (0) target = $region5
  $region4: #{mlp_forward.1} parent=0 // pred_region
    _
  $region5: #{mlp_forward.1} parent=0 // pred_fallthru
    _
  // Predicated region
  $region6: #{mlp_forward.1} parent=0 // pred_check
    _
  $region7: #{mlp_forward.1} parent=0 // pred_check_branch
    %15 = sbr.rel (0) target = $region9
  $region8: #{mlp_forward.1} parent=0 // pred_region
    _
  $region9: #{mlp_forward.1} parent=0 // pred_fallthru
    _
  // Predicated region
  $region10: #{mlp_forward.1} parent=0 // pred_check
    _
  $region11: #{mlp_forward.1} parent=0 // pred_check_branch
    %17 = sbr.rel (0) target = $region13
  $region12: #{mlp_forward.1} parent=0 // pred_region
    _
  $region13: #{mlp_forward.1} parent=0 // pred_fallthru
    _
  // Predicated region
  $region14: #{mlp_forward.1} parent=0 // pred_check
    _
  $region15: #{mlp_forward.1} parent=0 // pred_check_branch
    %19 = sbr.rel (0) target = $region17
  $region16: #{mlp_forward.1} parent=0 // pred_region
    _
  $region17: #{mlp_forward.1} parent=0 // pred_fallthru
    _
  // Predicated region
  $region18: #{mlp_forward.1} parent=0 // pred_check
    _
  $region19: #{mlp_forward.1} parent=0 // pred_check_branch
    %21 = sbr.rel (0) target = $region21
  $region20: #{mlp_forward.1} parent=0 // pred_region
    _
  $region21: #{mlp_forward.1} parent=0 // pred_fallthru
    _
  // Predicated region
  $region22: #{mlp_forward.1} parent=0 // pred_check
    _
  $region23: #{mlp_forward.1} parent=0 // pred_check_branch
    %23 = sbr.rel (0) target = $region25
  $region24: #{mlp_forward.1} parent=0 // pred_region
    _
  $region25: #{mlp_forward.1} parent=0 // pred_fallthru
    _
  // Predicated region
  $region26: #{mlp_forward.1} parent=0 // pred_check
    _
  $region27: #{mlp_forward.1} parent=0 // pred_check_branch
    %25 = sbr.rel (0) target = $region29
  $region28: #{mlp_forward.1} parent=0 // pred_region
    _
  $region29: #{mlp_forward.1} parent=0 // pred_fallthru
    _
  %v27 = vld [vmem:[%s0] sm:$0xff]
  %v28 = vld [vmem:[%s0 + $0x8] sm:$0xff]
  %v29 = vld [vmem:[%s0 + $0x10] sm:$0xff]
  %v30 = vld [vmem:[%s0 + $0x18] sm:$0xff]
  %v31 = vld [vmem:[%s0 + $0x20] sm:$0xff]
  %v32 = vld [vmem:[%s0 + $0x28] sm:$0xff]
  %v33 = vld [vmem:[%s0 + $0x30] sm:$0xff]
  %v34 = vld [vmem:[%s0 + $0x38] sm:$0xff]
  %v35 = vld [vmem:[%s0 + $0x40] sm:$0xff]
  %v36 = vld [vmem:[%s0 + $0x48] sm:$0xff]
  %v37 = vld [vmem:[%s0 + $0x50] sm:$0xff]
  %v38 = vld [vmem:[%s0 + $0x58] sm:$0xff]
  %v39 = vld [vmem:[%s0 + $0x60] sm:$0xff]
  %v40 = vld [vmem:[%s0 + $0x68] sm:$0xff]
  %v41 = vld [vmem:[%s0 + $0x70] sm:$0xff]
  %v42 = vld [vmem:[%s0 + $0x78] sm:$0xff]
  %v43 = vld [vmem:[%s2] sm:$0x1]
  %v44 = vpack.c.bf16 %v28, %v27
  %v45 = vpack.c.bf16 %v30, %v29
  %v46 = vpack.c.bf16 %v32, %v31
  %v47 = vpack.c.bf16 %v34, %v33
  %v48 = vpack.c.bf16 %v36, %v35
  %v49 = vpack.c.bf16 %v38, %v37
  %v50 = vpack.c.bf16 %v40, %v39
  %v51 = vpack.c.bf16 %v42, %v41
  %v52 = vld [vmem:[%s1] sm:$0xf]
  %v53 = vld [vmem:[%s1 + $0x4] sm:$0xf]
  %v54 = vld [vmem:[%s1 + $0x8] sm:$0xf]
  %v55 = vld [vmem:[%s1 + $0xc] sm:$0xf]
  %v57 = vlaneseq
  %v58 = vshrl.u32 %v57, 7
  %v59 = vsub.s32 0, %v58
  %v60 = vrot.slane %v43, %v59
  %v66 = vunpack.c.l.b16 %v52
  %v67 = vunpack.c.l.b16 %v53
  %v68 = vunpack.c.l.b16 %v54
  %v69 = vunpack.c.l.b16 %v55
  %v70 = vpack.c.b16 %v67, %v66
  %v71 = vpack.c.b16 %v69, %v68
  %vm74 = vcmask 261120
  %v76 = vsel %vm74, %v44, 0
  %v79 = vsel %vm74, %v45, 0
  %v82 = vsel %vm74, %v46, 0
  %v85 = vsel %vm74, %v47, 0
  %v88 = vsel %vm74, %v48, 0
  %v91 = vsel %vm74, %v49, 0
  %v94 = vsel %vm74, %v50, 0
  %v97 = vsel %vm74, %v51, 0
  %99 = vmatprep.subr.bf16.mxu0 0
  %100 = vmatpush1.bf16.msra.mxu0 0
  %101 = vmatprep.subr.bf16.mxu0 0
  %102 = vmatpush1.bf16.msra.mxu0 0
  %103 = vmatprep.subr.bf16.mxu0 0
  %104 = vmatpush1.bf16.msra.mxu0 0
  %105 = vmatprep.subr.bf16.mxu0 0
  %106 = vmatpush1.bf16.msra.mxu0 0
  %107 = vmatprep.subr.bf16.mxu0 0
  %108 = vmatpush1.bf16.msra.mxu0 0
  %109 = vmatprep.subr.bf16.mxu0 0
  %110 = vmatpush1.bf16.msra.mxu0 0
  %111 = vmatprep.subr.bf16.mxu0 0
  %112 = vmatpush1.bf16.msra.mxu0 %v71
  %113 = vmatprep.subr.bf16.mxu0 0
  %114 = vmatpush1.bf16.msra.mxu0 %v70
  %115 = vmatprep.subr.bf16.mxu0 0
  %116 = vmatpush2.bf16.msra.mxu0 0
  %117 = vmatprep.subr.bf16.mxu0 0
  %118 = vmatpush2.bf16.msra.mxu0 0
  %119 = vmatprep.subr.bf16.mxu0 0
  %120 = vmatpush2.bf16.msra.mxu0 0
  %121 = vmatprep.subr.bf16.mxu0 0
  %122 = vmatpush2.bf16.msra.mxu0 0
  %123 = vmatprep.subr.bf16.mxu0 0
  %124 = vmatpush2.bf16.msra.mxu0 0
  %125 = vmatprep.subr.bf16.mxu0 0
  %126 = vmatpush2.bf16.msra.mxu0 0
  %127 = vmatprep.subr.bf16.mxu0 0
  %128 = vmatpush2.bf16.msra.mxu0 0
  %129 = vmatprep.subr.bf16.mxu0 0
  %130 = vmatpush2.bf16.msra.mxu0 0
  %131 = vmatprep.mubr.bf16.mxu0 0
  %132 = vmatmul.mubr.bf16.gmra.mxu0 %v76
  %v133 = vpop.f32.mrf.mxu0
  %v134 = vadd.f32 %v60, %v133
  %v135 = vpop.f32.mrf.mxu0
  %v136 = vpop.f32.mrf.mxu0
  %v137 = vadd.f32 %v60, %v136
  %v138 = vpop.f32.mrf.mxu0
  %139 = vmatprep.mubr.bf16.mxu0 0
  %140 = vmatmul.mubr.bf16.gmra.mxu0 %v79
  %v141 = vpop.f32.mrf.mxu0
  %v142 = vadd.f32 %v60, %v141
  %v143 = vpop.f32.mrf.mxu0
  %v144 = vpop.f32.mrf.mxu0
  %v145 = vadd.f32 %v60, %v144
  %v146 = vpop.f32.mrf.mxu0
  %147 = vmatprep.mubr.bf16.mxu0 0
  %148 = vmatmul.mubr.bf16.gmra.mxu0 %v82
  %v149 = vpop.f32.mrf.mxu0
  %v150 = vadd.f32 %v60, %v149
  %v151 = vpop.f32.mrf.mxu0
  %v152 = vpop.f32.mrf.mxu0
  %v153 = vadd.f32 %v60, %v152
  %v154 = vpop.f32.mrf.mxu0
  %155 = vmatprep.mubr.bf16.mxu0 0
  %156 = vmatmul.mubr.bf16.gmra.mxu0 %v85
  %v157 = vpop.f32.mrf.mxu0
  %v158 = vadd.f32 %v60, %v157
  %v159 = vpop.f32.mrf.mxu0
  %v160 = vpop.f32.mrf.mxu0
  %v161 = vadd.f32 %v60, %v160
  %v162 = vpop.f32.mrf.mxu0
  %163 = vmatprep.mubr.bf16.mxu0 0
  %164 = vmatmul.mubr.bf16.gmra.mxu0 %v88
  %v165 = vpop.f32.mrf.mxu0
  %v166 = vadd.f32 %v60, %v165
  %v167 = vpop.f32.mrf.mxu0
  %v168 = vpop.f32.mrf.mxu0
  %v169 = vadd.f32 %v60, %v168
  %v170 = vpop.f32.mrf.mxu0
  %171 = vmatprep.mubr.bf16.mxu0 0
  %172 = vmatmul.mubr.bf16.gmra.mxu0 %v91
  %v173 = vpop.f32.mrf.mxu0
  %v174 = vadd.f32 %v60, %v173
  %v175 = vpop.f32.mrf.mxu0
  %v176 = vpop.f32.mrf.mxu0
  %v177 = vadd.f32 %v60, %v176
  %v178 = vpop.f32.mrf.mxu0
  %179 = vmatprep.mubr.bf16.mxu0 0
  %180 = vmatmul.mubr.bf16.gmra.mxu0 %v94
  %v181 = vpop.f32.mrf.mxu0
  %v182 = vadd.f32 %v60, %v181
  %v183 = vpop.f32.mrf.mxu0
  %v184 = vpop.f32.mrf.mxu0
  %v185 = vadd.f32 %v60, %v184
  %v186 = vpop.f32.mrf.mxu0
  %187 = vmatprep.mubr.bf16.mxu0 0
  %188 = vmatmul.mubr.bf16.gmra.mxu0 %v97
  %v189 = vpop.f32.mrf.mxu0
  %v190 = vadd.f32 %v60, %v189
  %v191 = vpop.f32.mrf.mxu0
  %v192 = vpop.f32.mrf.mxu0
  %v193 = vadd.f32 %v60, %v192
  %v194 = vpop.f32.mrf.mxu0
  %195 = vdwg.mxu0
  %v196 = vpack.c.bf16 %v137, %v134
  %v197 = vpack.c.bf16 %v145, %v142
  %v198 = vpack.c.bf16 %v153, %v150
  %v199 = vpack.c.bf16 %v161, %v158
  %v200 = vpack.c.bf16 %v169, %v166
  %v201 = vpack.c.bf16 %v177, %v174
  %v202 = vpack.c.bf16 %v185, %v182
  %v203 = vpack.c.bf16 %v193, %v190
  %v204 = vmax.bf16 %v196, 0
  %v205 = vmax.bf16 %v197, 0
  %v206 = vmax.bf16 %v198, 0
  %v207 = vmax.bf16 %v199, 0
  %v208 = vmax.bf16 %v200, 0
  %v209 = vmax.bf16 %v201, 0
  %v210 = vmax.bf16 %v202, 0
  %v211 = vmax.bf16 %v203, 0
  %v212 = vld [vmem:[%s4] sm:$0x1]
  %v213 = vld [vmem:[%s3] sm:$0xf]
  %v214 = vld [vmem:[%s3 + $0x4] sm:$0xf]
  %v215 = vld [vmem:[%s3 + $0x8] sm:$0xf]
  %v216 = vld [vmem:[%s3 + $0xc] sm:$0xf]
  %v217 = vld [vmem:[%s3 + $0x10] sm:$0xf]
  %v218 = vld [vmem:[%s3 + $0x14] sm:$0xf]
  %v219 = vld [vmem:[%s3 + $0x18] sm:$0xf]
  %v220 = vld [vmem:[%s3 + $0x1c] sm:$0xf]
  %v222 = vlaneseq
  %v223 = vshrl.u32 %v222, 7
  %v224 = vsub.s32 0, %v223
  %v225 = vrot.slane %v212, %v224
  %v235 = vunpack.c.l.b16 %v213
  %v236 = vunpack.c.l.b16 %v214
  %v237 = vunpack.c.l.b16 %v215
  %v238 = vunpack.c.l.b16 %v216
  %v239 = vunpack.c.l.b16 %v217
  %v240 = vunpack.c.l.b16 %v218
  %v241 = vunpack.c.l.b16 %v219
  %v242 = vunpack.c.l.b16 %v220
  %v243 = vpack.c.b16 %v236, %v235
  %v244 = vpack.c.b16 %v238, %v237
  %v245 = vpack.c.b16 %v240, %v239
  %v246 = vpack.c.b16 %v242, %v241
  %vm251 = vcmask 523264
  %v253 = vsel %vm251, %v204, 0
  %v256 = vsel %vm251, %v205, 0
  %v259 = vsel %vm251, %v206, 0
  %v262 = vsel %vm251, %v207, 0
  %v265 = vsel %vm251, %v208, 0
  %v268 = vsel %vm251, %v209, 0
  %v271 = vsel %vm251, %v210, 0
  %v274 = vsel %vm251, %v211, 0
  %276 = vmatprep.subr.bf16.mxu0 0
  %277 = vmatpush1.bf16.msra.mxu0 0
  %278 = vmatprep.subr.bf16.mxu0 0
  %279 = vmatpush1.bf16.msra.mxu0 0
  %280 = vmatprep.subr.bf16.mxu0 0
  %281 = vmatpush1.bf16.msra.mxu0 0
  %282 = vmatprep.subr.bf16.mxu0 0
  %283 = vmatpush1.bf16.msra.mxu0 0
  %284 = vmatprep.subr.bf16.mxu0 0
  %285 = vmatpush1.bf16.msra.mxu0 %v246
  %286 = vmatprep.subr.bf16.mxu0 0
  %287 = vmatpush1.bf16.msra.mxu0 %v245
  %288 = vmatprep.subr.bf16.mxu0 0
  %289 = vmatpush1.bf16.msra.mxu0 %v244
  %290 = vmatprep.subr.bf16.mxu0 0
  %291 = vmatpush1.bf16.msra.mxu0 %v243
  %292 = vmatprep.subr.bf16.mxu0 0
  %293 = vmatpush2.bf16.msra.mxu0 0
  %294 = vmatprep.subr.bf16.mxu0 0
  %295 = vmatpush2.bf16.msra.mxu0 0
  %296 = vmatprep.subr.bf16.mxu0 0
  %297 = vmatpush2.bf16.msra.mxu0 0
  %298 = vmatprep.subr.bf16.mxu0 0
  %299 = vmatpush2.bf16.msra.mxu0 0
  %300 = vmatprep.subr.bf16.mxu0 0
  %301 = vmatpush2.bf16.msra.mxu0 0
  %302 = vmatprep.subr.bf16.mxu0 0
  %303 = vmatpush2.bf16.msra.mxu0 0
  %304 = vmatprep.subr.bf16.mxu0 0
  %305 = vmatpush2.bf16.msra.mxu0 0
  %306 = vmatprep.subr.bf16.mxu0 0
  %307 = vmatpush2.bf16.msra.mxu0 0
  %308 = vmatprep.mubr.bf16.mxu0 0
  %309 = vmatmul.mubr.bf16.gmra.mxu0 %v253
  %v310 = vpop.f32.mrf.mxu0
  %v311 = vadd.f32 %v225, %v310
  %v312 = vpop.f32.mrf.mxu0
  %v313 = vpop.f32.mrf.mxu0
  %v314 = vadd.f32 %v225, %v313
  %v315 = vpop.f32.mrf.mxu0
  %316 = vmatprep.mubr.bf16.mxu0 0
  %317 = vmatmul.mubr.bf16.gmra.mxu0 %v256
  %v318 = vpop.f32.mrf.mxu0
  %v319 = vadd.f32 %v225, %v318
  %v320 = vpop.f32.mrf.mxu0
  %v321 = vpop.f32.mrf.mxu0
  %v322 = vadd.f32 %v225, %v321
  %v323 = vpop.f32.mrf.mxu0
  %324 = vmatprep.mubr.bf16.mxu0 0
  %325 = vmatmul.mubr.bf16.gmra.mxu0 %v259
  %v326 = vpop.f32.mrf.mxu0
  %v327 = vadd.f32 %v225, %v326
  %v328 = vpop.f32.mrf.mxu0
  %v329 = vpop.f32.mrf.mxu0
  %v330 = vadd.f32 %v225, %v329
  %v331 = vpop.f32.mrf.mxu0
  %332 = vmatprep.mubr.bf16.mxu0 0
  %333 = vmatmul.mubr.bf16.gmra.mxu0 %v262
  %v334 = vpop.f32.mrf.mxu0
  %v335 = vadd.f32 %v225, %v334
  %v336 = vpop.f32.mrf.mxu0
  %v337 = vpop.f32.mrf.mxu0
  %v338 = vadd.f32 %v225, %v337
  %v339 = vpop.f32.mrf.mxu0
  %340 = vmatprep.mubr.bf16.mxu0 0
  %341 = vmatmul.mubr.bf16.gmra.mxu0 %v265
  %v342 = vpop.f32.mrf.mxu0
  %v343 = vadd.f32 %v225, %v342
  %v344 = vpop.f32.mrf.mxu0
  %v345 = vpop.f32.mrf.mxu0
  %v346 = vadd.f32 %v225, %v345
  %v347 = vpop.f32.mrf.mxu0
  %348 = vmatprep.mubr.bf16.mxu0 0
  %349 = vmatmul.mubr.bf16.gmra.mxu0 %v268
  %v350 = vpop.f32.mrf.mxu0
  %v351 = vadd.f32 %v225, %v350
  %v352 = vpop.f32.mrf.mxu0
  %v353 = vpop.f32.mrf.mxu0
  %v354 = vadd.f32 %v225, %v353
  %v355 = vpop.f32.mrf.mxu0
  %356 = vmatprep.mubr.bf16.mxu0 0
  %357 = vmatmul.mubr.bf16.gmra.mxu0 %v271
  %v358 = vpop.f32.mrf.mxu0
  %v359 = vadd.f32 %v225, %v358
  %v360 = vpop.f32.mrf.mxu0
  %v361 = vpop.f32.mrf.mxu0
  %v362 = vadd.f32 %v225, %v361
  %v363 = vpop.f32.mrf.mxu0
  %364 = vmatprep.mubr.bf16.mxu0 0
  %365 = vmatmul.mubr.bf16.gmra.mxu0 %v274
  %v366 = vpop.f32.mrf.mxu0
  %v367 = vadd.f32 %v225, %v366
  %v368 = vpop.f32.mrf.mxu0
  %v369 = vpop.f32.mrf.mxu0
  %v370 = vadd.f32 %v225, %v369
  %v371 = vpop.f32.mrf.mxu0
  %372 = vdwg.mxu0
  %v373 = vpack.c.bf16 %v314, %v311
  %v374 = vpack.c.bf16 %v322, %v319
  %v375 = vpack.c.bf16 %v330, %v327
  %v376 = vpack.c.bf16 %v338, %v335
  %v377 = vpack.c.bf16 %v346, %v343
  %v378 = vpack.c.bf16 %v354, %v351
  %v379 = vpack.c.bf16 %v362, %v359
  %v380 = vpack.c.bf16 %v370, %v367
  %v381 = vmax.bf16 %v373, 0
  %v382 = vmax.bf16 %v374, 0
  %v383 = vmax.bf16 %v375, 0
  %v384 = vmax.bf16 %v376, 0
  %v385 = vmax.bf16 %v377, 0
  %v386 = vmax.bf16 %v378, 0
  %v387 = vmax.bf16 %v379, 0
  %v388 = vmax.bf16 %v380, 0
  %v389 = vld [vmem:[%s6] sm:$0x1]
  %v390 = vld [vmem:[%s5] sm:$0xf]
  %v391 = vld [vmem:[%s5 + $0x4] sm:$0xf]
  %v392 = vld [vmem:[%s5 + $0x8] sm:$0xf]
  %v393 = vld [vmem:[%s5 + $0xc] sm:$0xf]
  %v395 = vlaneseq
  %v396 = vshrl.u32 %v395, 7
  %v397 = vsub.s32 0, %v396
  %v398 = vrot.slane %v389, %v397
  %v404 = vunpack.c.l.b16 %v390
  %v405 = vunpack.c.l.b16 %v391
  %v406 = vunpack.c.l.b16 %v392
  %v407 = vunpack.c.l.b16 %v393
  %v408 = vpack.c.b16 %v405, %v404
  %v409 = vpack.c.b16 %v407, %v406
  %v413 = vsel %vm74, %v381, 0
  %v416 = vsel %vm74, %v382, 0
  %v419 = vsel %vm74, %v383, 0
  %v422 = vsel %vm74, %v384, 0
  %v425 = vsel %vm74, %v385, 0
  %v428 = vsel %vm74, %v386, 0
  %v431 = vsel %vm74, %v387, 0
  %v434 = vsel %vm74, %v388, 0
  %436 = vmatprep.subr.bf16.mxu0 0
  %437 = vmatpush1.bf16.msra.mxu0 0
  %438 = vmatprep.subr.bf16.mxu0 0
  %439 = vmatpush1.bf16.msra.mxu0 0
  %440 = vmatprep.subr.bf16.mxu0 0
  %441 = vmatpush1.bf16.msra.mxu0 0
  %442 = vmatprep.subr.bf16.mxu0 0
  %443 = vmatpush1.bf16.msra.mxu0 0
  %444 = vmatprep.subr.bf16.mxu0 0
  %445 = vmatpush1.bf16.msra.mxu0 0
  %446 = vmatprep.subr.bf16.mxu0 0
  %447 = vmatpush1.bf16.msra.mxu0 0
  %448 = vmatprep.subr.bf16.mxu0 0
  %449 = vmatpush1.bf16.msra.mxu0 %v409
  %450 = vmatprep.subr.bf16.mxu0 0
  %451 = vmatpush1.bf16.msra.mxu0 %v408
  %452 = vmatprep.subr.bf16.mxu0 0
  %453 = vmatpush2.bf16.msra.mxu0 0
  %454 = vmatprep.subr.bf16.mxu0 0
  %455 = vmatpush2.bf16.msra.mxu0 0
  %456 = vmatprep.subr.bf16.mxu0 0
  %457 = vmatpush2.bf16.msra.mxu0 0
  %458 = vmatprep.subr.bf16.mxu0 0
  %459 = vmatpush2.bf16.msra.mxu0 0
  %460 = vmatprep.subr.bf16.mxu0 0
  %461 = vmatpush2.bf16.msra.mxu0 0
  %462 = vmatprep.subr.bf16.mxu0 0
  %463 = vmatpush2.bf16.msra.mxu0 0
  %464 = vmatprep.subr.bf16.mxu0 0
  %465 = vmatpush2.bf16.msra.mxu0 0
  %466 = vmatprep.subr.bf16.mxu0 0
  %467 = vmatpush2.bf16.msra.mxu0 0
  %468 = vmatprep.mubr.bf16.mxu0 0
  %469 = vmatmul.mubr.bf16.gmra.mxu0 %v413
  %v470 = vpop.f32.mrf.mxu0
  %v471 = vadd.f32 %v398, %v470
  %v472 = vpop.f32.mrf.mxu0
  %v473 = vpop.f32.mrf.mxu0
  %v474 = vadd.f32 %v398, %v473
  %v475 = vpop.f32.mrf.mxu0
  %476 = vmatprep.mubr.bf16.mxu0 0
  %477 = vmatmul.mubr.bf16.gmra.mxu0 %v416
  %v478 = vpop.f32.mrf.mxu0
  %v479 = vadd.f32 %v398, %v478
  %v480 = vpop.f32.mrf.mxu0
  %v481 = vpop.f32.mrf.mxu0
  %v482 = vadd.f32 %v398, %v481
  %v483 = vpop.f32.mrf.mxu0
  %484 = vmatprep.mubr.bf16.mxu0 0
  %485 = vmatmul.mubr.bf16.gmra.mxu0 %v419
  %v486 = vpop.f32.mrf.mxu0
  %v487 = vadd.f32 %v398, %v486
  %v488 = vpop.f32.mrf.mxu0
  %v489 = vpop.f32.mrf.mxu0
  %v490 = vadd.f32 %v398, %v489
  %v491 = vpop.f32.mrf.mxu0
  %492 = vmatprep.mubr.bf16.mxu0 0
  %493 = vmatmul.mubr.bf16.gmra.mxu0 %v422
  %v494 = vpop.f32.mrf.mxu0
  %v495 = vadd.f32 %v398, %v494
  %v496 = vpop.f32.mrf.mxu0
  %v497 = vpop.f32.mrf.mxu0
  %v498 = vadd.f32 %v398, %v497
  %v499 = vpop.f32.mrf.mxu0
  %500 = vmatprep.mubr.bf16.mxu0 0
  %501 = vmatmul.mubr.bf16.gmra.mxu0 %v425
  %v502 = vpop.f32.mrf.mxu0
  %v503 = vadd.f32 %v398, %v502
  %v504 = vpop.f32.mrf.mxu0
  %v505 = vpop.f32.mrf.mxu0
  %v506 = vadd.f32 %v398, %v505
  %v507 = vpop.f32.mrf.mxu0
  %508 = vmatprep.mubr.bf16.mxu0 0
  %509 = vmatmul.mubr.bf16.gmra.mxu0 %v428
  %v510 = vpop.f32.mrf.mxu0
  %v511 = vadd.f32 %v398, %v510
  %v512 = vpop.f32.mrf.mxu0
  %v513 = vpop.f32.mrf.mxu0
  %v514 = vadd.f32 %v398, %v513
  %v515 = vpop.f32.mrf.mxu0
  %516 = vmatprep.mubr.bf16.mxu0 0
  %517 = vmatmul.mubr.bf16.gmra.mxu0 %v431
  %v518 = vpop.f32.mrf.mxu0
  %v519 = vadd.f32 %v398, %v518
  %v520 = vpop.f32.mrf.mxu0
  %v521 = vpop.f32.mrf.mxu0
  %v522 = vadd.f32 %v398, %v521
  %v523 = vpop.f32.mrf.mxu0
  %524 = vmatprep.mubr.bf16.mxu0 0
  %525 = vmatmul.mubr.bf16.gmra.mxu0 %v434
  %v526 = vpop.f32.mrf.mxu0
  %v527 = vadd.f32 %v398, %v526
  %v528 = vpop.f32.mrf.mxu0
  %v529 = vpop.f32.mrf.mxu0
  %v530 = vadd.f32 %v398, %v529
  %v531 = vpop.f32.mrf.mxu0
  %532 = vdwg.mxu0
  %533 = vmax.xlane.f32.xlu0 %v471
  %v534 = vpop.xlane.xlu0 %533
  %535 = vmax.xlane.f32.xlu0 %v474
  %v536 = vpop.xlane.xlu0 %535
  %537 = vmax.xlane.f32.xlu0 %v479
  %v538 = vpop.xlane.xlu0 %537
  %539 = vmax.xlane.f32.xlu0 %v482
  %v540 = vpop.xlane.xlu0 %539
  %541 = vmax.xlane.f32.xlu0 %v487
  %v542 = vpop.xlane.xlu0 %541
  %543 = vmax.xlane.f32.xlu0 %v490
  %v544 = vpop.xlane.xlu0 %543
  %545 = vmax.xlane.f32.xlu0 %v495
  %v546 = vpop.xlane.xlu0 %545
  %547 = vmax.xlane.f32.xlu0 %v498
  %v548 = vpop.xlane.xlu0 %547
  %549 = vmax.xlane.f32.xlu0 %v503
  %v550 = vpop.xlane.xlu0 %549
  %551 = vmax.xlane.f32.xlu0 %v506
  %v552 = vpop.xlane.xlu0 %551
  %553 = vmax.xlane.f32.xlu0 %v511
  %v554 = vpop.xlane.xlu0 %553
  %555 = vmax.xlane.f32.xlu0 %v514
  %v556 = vpop.xlane.xlu0 %555
  %557 = vmax.xlane.f32.xlu0 %v519
  %v558 = vpop.xlane.xlu0 %557
  %559 = vmax.xlane.f32.xlu0 %v522
  %v560 = vpop.xlane.xlu0 %559
  %561 = vmax.xlane.f32.xlu0 %v527
  %v562 = vpop.xlane.xlu0 %561
  %563 = vmax.xlane.f32.xlu0 %v530
  %v564 = vpop.xlane.xlu0 %563
  %v565 = vsub.f32 %v471, %v534
  %v566 = vsub.f32 %v474, %v536
  %v567 = vsub.f32 %v479, %v538
  %v568 = vsub.f32 %v482, %v540
  %v569 = vsub.f32 %v487, %v542
  %v570 = vsub.f32 %v490, %v544
  %v571 = vsub.f32 %v495, %v546
  %v572 = vsub.f32 %v498, %v548
  %v573 = vsub.f32 %v503, %v550
  %v574 = vsub.f32 %v506, %v552
  %v575 = vsub.f32 %v511, %v554
  %v576 = vsub.f32 %v514, %v556
  %v577 = vsub.f32 %v519, %v558
  %v578 = vsub.f32 %v522, %v560
  %v579 = vsub.f32 %v527, %v562
  %v580 = vsub.f32 %v530, %v564
  %v581 = vmul.f32 %v565, 1.442695
  %v582 = vpow.pop %v581
  %v583 = vmul.f32 %v566, 1.442695
  %v584 = vpow.pop %v583
  %v585 = vmul.f32 %v567, 1.442695
  %v586 = vpow.pop %v585
  %v587 = vmul.f32 %v568, 1.442695
  %v588 = vpow.pop %v587
  %v589 = vmul.f32 %v569, 1.442695
  %v590 = vpow.pop %v589
  %v591 = vmul.f32 %v570, 1.442695
  %v592 = vpow.pop %v591
  %v593 = vmul.f32 %v571, 1.442695
  %v594 = vpow.pop %v593
  %v595 = vmul.f32 %v572, 1.442695
  %v596 = vpow.pop %v595
  %v597 = vmul.f32 %v573, 1.442695
  %v598 = vpow.pop %v597
  %v599 = vmul.f32 %v574, 1.442695
  %v600 = vpow.pop %v599
  %v601 = vmul.f32 %v575, 1.442695
  %v602 = vpow.pop %v601
  %v603 = vmul.f32 %v576, 1.442695
  %v604 = vpow.pop %v603
  %v605 = vmul.f32 %v577, 1.442695
  %v606 = vpow.pop %v605
  %v607 = vmul.f32 %v578, 1.442695
  %v608 = vpow.pop %v607
  %v609 = vmul.f32 %v579, 1.442695
  %v610 = vpow.pop %v609
  %v611 = vmul.f32 %v580, 1.442695
  %v612 = vpow.pop %v611
  %613 = vadd.xlane.f32.xlu0 %v582
  %v614 = vpop.xlane.xlu0 %613
  %615 = vadd.xlane.f32.xlu0 %v584
  %v616 = vpop.xlane.xlu0 %615
  %617 = vadd.xlane.f32.xlu0 %v586
  %v618 = vpop.xlane.xlu0 %617
  %619 = vadd.xlane.f32.xlu0 %v588
  %v620 = vpop.xlane.xlu0 %619
  %621 = vadd.xlane.f32.xlu0 %v590
  %v622 = vpop.xlane.xlu0 %621
  %623 = vadd.xlane.f32.xlu0 %v592
  %v624 = vpop.xlane.xlu0 %623
  %625 = vadd.xlane.f32.xlu0 %v594
  %v626 = vpop.xlane.xlu0 %625
  %627 = vadd.xlane.f32.xlu0 %v596
  %v628 = vpop.xlane.xlu0 %627
  %629 = vadd.xlane.f32.xlu0 %v598
  %v630 = vpop.xlane.xlu0 %629
  %631 = vadd.xlane.f32.xlu0 %v600
  %v632 = vpop.xlane.xlu0 %631
  %633 = vadd.xlane.f32.xlu0 %v602
  %v634 = vpop.xlane.xlu0 %633
  %635 = vadd.xlane.f32.xlu0 %v604
  %v636 = vpop.xlane.xlu0 %635
  %637 = vadd.xlane.f32.xlu0 %v606
  %v638 = vpop.xlane.xlu0 %637
  %639 = vadd.xlane.f32.xlu0 %v608
  %v640 = vpop.xlane.xlu0 %639
  %641 = vadd.xlane.f32.xlu0 %v610
  %v642 = vpop.xlane.xlu0 %641
  %643 = vadd.xlane.f32.xlu0 %v612
  %v644 = vpop.xlane.xlu0 %643
  %v645 = vlog2.pop %v614
  %v646 = vmul.f32 %v645, 0.6931472
  %v647 = vlog2.pop %v616
  %v648 = vmul.f32 %v647, 0.6931472
  %v649 = vlog2.pop %v618
  %v650 = vmul.f32 %v649, 0.6931472
  %v651 = vlog2.pop %v620
  %v652 = vmul.f32 %v651, 0.6931472
  %v653 = vlog2.pop %v622
  %v654 = vmul.f32 %v653, 0.6931472
  %v655 = vlog2.pop %v624
  %v656 = vmul.f32 %v655, 0.6931472
  %v657 = vlog2.pop %v626
  %v658 = vmul.f32 %v657, 0.6931472
  %v659 = vlog2.pop %v628
  %v660 = vmul.f32 %v659, 0.6931472
  %v661 = vlog2.pop %v630
  %v662 = vmul.f32 %v661, 0.6931472
  %v663 = vlog2.pop %v632
  %v664 = vmul.f32 %v663, 0.6931472
  %v665 = vlog2.pop %v634
  %v666 = vmul.f32 %v665, 0.6931472
  %v667 = vlog2.pop %v636
  %v668 = vmul.f32 %v667, 0.6931472
  %v669 = vlog2.pop %v638
  %v670 = vmul.f32 %v669, 0.6931472
  %v671 = vlog2.pop %v640
  %v672 = vmul.f32 %v671, 0.6931472
  %v673 = vlog2.pop %v642
  %v674 = vmul.f32 %v673, 0.6931472
  %v675 = vlog2.pop %v644
  %v676 = vmul.f32 %v675, 0.6931472
  %v677 = vsub.f32 %v565, %v646
  %v678 = vsub.f32 %v566, %v648
  %v679 = vsub.f32 %v567, %v650
  %v680 = vsub.f32 %v568, %v652
  %v681 = vsub.f32 %v569, %v654
  %v682 = vsub.f32 %v570, %v656
  %v683 = vsub.f32 %v571, %v658
  %v684 = vsub.f32 %v572, %v660
  %v685 = vsub.f32 %v573, %v662
  %v686 = vsub.f32 %v574, %v664
  %v687 = vsub.f32 %v575, %v666
  %v688 = vsub.f32 %v576, %v668
  %v689 = vsub.f32 %v577, %v670
  %v690 = vsub.f32 %v578, %v672
  %v691 = vsub.f32 %v579, %v674
  %v692 = vsub.f32 %v580, %v676
  %693 = vst [vmem:[%s7] sm:$0xff] %v677
  %694 = vst [vmem:[%s7 + $0x8] sm:$0xff] %v678
  %695 = vst [vmem:[%s7 + $0x10] sm:$0xff] %v679
  %696 = vst [vmem:[%s7 + $0x18] sm:$0xff] %v680
  %697 = vst [vmem:[%s7 + $0x20] sm:$0xff] %v681
  %698 = vst [vmem:[%s7 + $0x28] sm:$0xff] %v682
  %699 = vst [vmem:[%s7 + $0x30] sm:$0xff] %v683
  %700 = vst [vmem:[%s7 + $0x38] sm:$0xff] %v684
  %701 = vst [vmem:[%s7 + $0x40] sm:$0xff] %v685
  %702 = vst [vmem:[%s7 + $0x48] sm:$0xff] %v686
  %703 = vst [vmem:[%s7 + $0x50] sm:$0xff] %v687
  %704 = vst [vmem:[%s7 + $0x58] sm:$0xff] %v688
  %705 = vst [vmem:[%s7 + $0x60] sm:$0xff] %v689
  %706 = vst [vmem:[%s7 + $0x68] sm:$0xff] %v690
  %707 = vst [vmem:[%s7 + $0x70] sm:$0xff] %v691
  %708 = vst [vmem:[%s7 + $0x78] sm:$0xff] %v692
  // Predicated region
  $region30: #{mlp_forward.1} parent=0 // pred_check
    _
  $region31: #{mlp_forward.1} parent=0 // pred_check_branch
    %710 = sbr.rel (0) target = $region33
  $region32: #{mlp_forward.1} parent=0 // pred_region
    _
  $region33: #{mlp_forward.1} parent=0 // pred_fallthru
    _
  // Predicated region
  $region34: #{mlp_forward.1} parent=0 // pred_check
    _
  $region35: #{mlp_forward.1} parent=0 // pred_check_branch
    %712 = sbr.rel (0) target = $region37
  $region36: #{mlp_forward.1} parent=0 // pred_region
    _
  $region37: #{mlp_forward.1} parent=0 // pred_fallthru
    _

</llo_original>
